<compile_context>
chip_gen: v7x
topology: tpu7x:2x2x1
jax: 0.10.0
libtpu: 0.0.40
codegen_flags: <defaults>
</compile_context>

<pallas_src>
import jax
import jax.numpy as jnp
from jax.experimental import pallas as pl
from jax.experimental.pallas import tpu as pltpu

# ----- Config (mirrors the PyTorch global Config) -----
VOCAB_SIZE = 32
HIDDEN = 32
SEQ = 8
BATCH = 2


def encoder_kernel(tok_ref, emb_ref, w_ref, bias_ref, out_ref):
    # tok_ref:  VMEM (B*S, 1) int32 -- flattened token ids
    # emb_ref:  VMEM (V, H)  f32    -- embedding table (row 0 == 0: padding_idx)
    # w_ref:    VMEM (H, H)  f32    -- linear weight, transposed to [in, out]
    # bias_ref: VMEM (1, H)  f32    -- linear bias
    # out_ref:  VMEM (B, H)  f32
    V, H = emb_ref.shape
    BS = tok_ref.shape[0]
    B = out_ref.shape[0]
    S = BS // B

    # Fuse Embedding and Linear on the MXU: fused[v, :] = emb[v, :] @ W^T.
    # Exact reassociation (each one-hot embedding row sums to 1); fused row 0
    # stays zero, preserving padding_idx=0 semantics.
    fused = jnp.dot(emb_ref[...], w_ref[...],
                    preferred_element_type=jnp.float32)               # (V, H)

    # Gather all B*S rows with a single one-hot MXU matmul (no serial
    # scalar-indexed loads, no concatenate).
    lane_id = jax.lax.broadcasted_iota(jnp.int32, (BS, V), dimension=1)
    onehot = (lane_id == tok_ref[...]).astype(jnp.float32)            # (B*S, V)
    h = jnp.dot(onehot, fused,
                preferred_element_type=jnp.float32)                   # (B*S, H)

    # Max-pool over the sequence (XLU sublane reduce), then add the bias once
    # per pooled row: max_s(x_s + b) == max_s(x_s) + b (exact, incl. padding).
    pooled = jnp.max(h.reshape(B, S, H), axis=1)                      # (B, H)
    out_ref[...] = pooled + bias_ref[...]                             # single store


def model_encoder_forward(tokens, emb_table, w_t, bias):
    B, S = tokens.shape
    V, H = emb_table.shape
    tok_flat = tokens.reshape(B * S, 1).astype(jnp.int32)
    bias2d = bias.reshape(1, H)
    # Toy sizes -> single invocation, no grid. If B/S/V scale up: add a
    # "parallel" batch grid axis (2 TCs on v7x) and tile / HBM-gather the
    # fused table instead of keeping V*H resident in VMEM.
    return pl.pallas_call(
        encoder_kernel,
        out_shape=jax.ShapeDtypeStruct((B, H), jnp.float32),
        in_specs=[
            pl.BlockSpec(memory_space=pltpu.MemorySpace.VMEM),   # token ids
            pl.BlockSpec(memory_space=pltpu.MemorySpace.VMEM),   # embedding table
            pl.BlockSpec(memory_space=pltpu.MemorySpace.VMEM),   # linear weight^T
            pl.BlockSpec(memory_space=pltpu.MemorySpace.VMEM),   # linear bias
        ],
        out_specs=pl.BlockSpec(memory_space=pltpu.MemorySpace.VMEM),
    )(tok_flat, emb_table, w_t, bias2d)


def reference_forward(tokens, emb_table, w_t, bias):
    # Original (unfused) semantics: embed -> dropout(eval) -> linear(+bias)
    # -> transpose -> adaptive max pool over sequence.
    emb = jnp.take(emb_table, tokens, axis=0)               # [B, S, H]
    h = jnp.einsum("bsh,ho->bso", emb, w_t) + bias          # [B, S, H]
    return jnp.max(h, axis=1)                               # [B, H]


if __name__ == "__main__":
    key = jax.random.PRNGKey(0)
    k_emb, k_w, k_b, k_tok = jax.random.split(key, 4)

    # Deterministic parameter init (shapes from the module __init__).
    emb_table = jax.random.normal(k_emb, (VOCAB_SIZE, HIDDEN), jnp.float32) * 0.02
    emb_table = emb_table.at[0].set(0.0)                    # padding_idx=0
    # nn.Linear(H, H): weight [out, in]; pass transposed [in, out].
    w = jax.random.normal(k_w, (HIDDEN, HIDDEN), jnp.float32) * 0.02
    w_t = w.T
    bias = jax.random.normal(k_b, (HIDDEN,), jnp.float32) * 0.02

    tokens = jax.random.randint(k_tok, (BATCH, SEQ), 0, VOCAB_SIZE, dtype=jnp.int32)
    tokens = tokens.at[0, -1].set(0)                        # exercise padding_idx path

    out = jax.block_until_ready(model_encoder_forward(tokens, emb_table, w_t, bias))
    ref = reference_forward(tokens, emb_table, w_t, bias)

    assert out.shape == (BATCH, HIDDEN)
    # Tolerance accounts for TPU default f32-matmul (bf16-pass) rounding
    # between the in-kernel MXU dots and the XLA reference einsum.
    assert jnp.allclose(out, ref, atol=1e-4, rtol=1e-4), "mismatch vs reference"

    print("KERNEL_OK")
</pallas_src>

<mosaic_0001>
module attributes {stable_mosaic.version = 11 : i64} {
  func.func @encoder_kernel(%arg0: memref<16x1xi32, #tpu.memory_space<vmem>>, %arg1: memref<32x32xf32, #tpu.memory_space<vmem>>, %arg2: memref<32x32xf32, #tpu.memory_space<vmem>>, %arg3: memref<1x32xf32, #tpu.memory_space<vmem>>, %arg4: memref<2x32xf32, #tpu.memory_space<vmem>>) attributes {dimension_semantics = [], scalar_prefetch = 0 : i64, scratch_operands = 0 : i64, tpu.core_type = #tpu.core_type<tc>} {
    %c0 = arith.constant 0 : index
    %c0_0 = arith.constant 0 : index
    %0 = vector.load %arg1[%c0, %c0_0] : memref<32x32xf32, #tpu.memory_space<vmem>>, vector<32x32xf32>
    %c0_1 = arith.constant 0 : index
    %c0_2 = arith.constant 0 : index
    %1 = vector.load %arg2[%c0_1, %c0_2] : memref<32x32xf32, #tpu.memory_space<vmem>>, vector<32x32xf32>
    %cst = arith.constant dense<0.000000e+00> : vector<32x32xf32>
    %2 = tpu.matmul %0, %1, %cst {dimension_numbers = #tpu.dot_dimension_numbers<[1], [0], [0], [1], [0, 0, 1, 1], [], []>} : vector<32x32xf32>, vector<32x32xf32>, vector<32x32xf32> -> vector<32x32xf32>
    %3 = tpu.iota {dimensions = array<i32: 1>} : vector<16x32xi32>
    %c0_3 = arith.constant 0 : index
    %c0_4 = arith.constant 0 : index
    %4 = vector.load %arg0[%c0_3, %c0_4] : memref<16x1xi32, #tpu.memory_space<vmem>>, vector<16x1xi32>
    %5 = vector.broadcast %4 : vector<16x1xi32> to vector<16x32xi32>
    %6 = arith.cmpi eq, %3, %5 : vector<16x32xi32>
    %7 = arith.extui %6 : vector<16x32xi1> to vector<16x32xi32>
    %8 = arith.sitofp %7 : vector<16x32xi32> to vector<16x32xf32>
    %cst_5 = arith.constant dense<0.000000e+00> : vector<16x32xf32>
    %9 = tpu.matmul %8, %2, %cst_5 {dimension_numbers = #tpu.dot_dimension_numbers<[1], [0], [0], [1], [0, 0, 1, 1], [], []>} : vector<16x32xf32>, vector<32x32xf32>, vector<16x32xf32> -> vector<16x32xf32>
    %10 = vector.shape_cast %9 : vector<16x32xf32> to vector<2x8x32xf32>
    %cst_6 = arith.constant dense<0xFF800000> : vector<2x32xf32>
    %11 = vector.multi_reduction <maximumf>, %10, %cst_6 [1] : vector<2x8x32xf32> to vector<2x32xf32>
    %c0_7 = arith.constant 0 : index
    %c0_8 = arith.constant 0 : index
    %12 = vector.load %arg3[%c0_7, %c0_8] : memref<1x32xf32, #tpu.memory_space<vmem>>, vector<1x32xf32>
    %13 = vector.broadcast %12 : vector<1x32xf32> to vector<2x32xf32>
    %14 = arith.addf %11, %13 : vector<2x32xf32>
    %c0_9 = arith.constant 0 : index
    %c0_10 = arith.constant 0 : index
    %15 = vector.load %arg4[%c0_9, %c0_10] : memref<2x32xf32, #tpu.memory_space<vmem>>, vector<2x32xf32>
    tpu.vector_store %arg4[%c0_9, %c0_10], %14 {strides = array<i32>} : memref<2x32xf32, #tpu.memory_space<vmem>>, vector<2x32xf32>,
    return
  }
}

</mosaic_0001>

<llo_original>
// kernel: tpu_custom_call.1
$region0: #{tpu_custom_call.1}
  #allocation0 [shape = 'u32[]', space=smem, size = 0x4, offset = 0x4, fixed_abs, tag = 'smem constant byte address 0x4 - core index']
  #allocation1 [shape = 'u32[144,128]{1,0:T(1,128)}', space=vmem, size = 0x12000, scoped, tag = 'internal scratch']
  %s0 = inlined_call_operand.vmem [shape: s32[16,1], index: 0, kind: input, shape index: {}]
  %s1 = inlined_call_operand.hbm [shape: f32[32,32], index: 1, kind: input, shape index: {}]
  %s2 = inlined_call_operand.hbm [shape: f32[32,32], index: 2, kind: input, shape index: {}]
  %s3 = inlined_call_operand.vmem [shape: f32[1,32], index: 3, kind: input, shape index: {}]
  %s4 = inlined_call_operand.hbm [shape: f32[2,32], index: 4, kind: output, shape index: {}]
  %s5 = sld [smem:[#allocation0]]
  $region34: #{tpu_custom_call.1} parent=0
    _
  %s7 = ssub.s32 1, %s5
  %s8 = scalar_select 0, %s7, %s5
  $region1: #{tpu_custom_call.1} parent=0
    #allocation2 [shape = 'u8[16384]{0}', space=vmem, size = 0x4000, scoped, tag = 'input window, operand 1, single buffered']
    #allocation3 [shape = 's32[1]{0}', space=sflag, size = 0x4, scoped, tag = 'scoped memory for tpu_custom_call.1']
    #allocation4 [shape = 's32[1]{0}', space=sflag, size = 0x4, scoped, tag = 'scoped memory for tpu_custom_call.1']
    #allocation5 [shape = 'u8[16384]{0}', space=vmem, size = 0x4000, scoped, tag = 'input window, operand 2, single buffered']
    #allocation6 [shape = 's32[1]{0}', space=sflag, size = 0x4, scoped, tag = 'scoped memory for tpu_custom_call.1']
    #allocation7 [shape = 'u8[1024]{0}', space=vmem, size = 0x400, scoped, tag = 'output window, operand 0, single buffered']
    %9 = vsyncpa [#allocation3], 0
    %10 = vsyncpa [#allocation6], 0
    %11 = vsyncpa [#allocation4], 0
    // Predicated region
    $region2: #{tpu_custom_call.1} parent=1 // pred_check
      _
    $region3: #{tpu_custom_call.1} parent=1 // pred_check_branch
      %13 = sbr.rel (0) target = $region5
    $region4: #{tpu_custom_call.1} parent=1 // pred_region
      _
    $region5: #{tpu_custom_call.1} parent=1 // pred_fallthru
      _
    // Predicated region
    $region6: #{tpu_custom_call.1} parent=1 // pred_check
      _
    $region7: #{tpu_custom_call.1} parent=1 // pred_check_branch
      %15 = sbr.rel (0) target = $region9
    $region8: #{tpu_custom_call.1} parent=1 // pred_region
      %s17 = ssub.s32 512, 512
      %18 = vsyncadd [#allocation3], %s17
      %s19 = sshll.u32 [#allocation2], 4
      %s20 = int_to_ptr.vmem [resolvable:$true] %s19
      %25 = dma.hbm_to_vmem [thread:$0]  %s1, 512, %s20, [#allocation3], 128, 128, 8
    $region9: #{tpu_custom_call.1} parent=1 // pred_fallthru
      _
    // Predicated region
    $region10: #{tpu_custom_call.1} parent=1 // pred_check
      _
    $region11: #{tpu_custom_call.1} parent=1 // pred_check_branch
      %27 = sbr.rel (0) target = $region13
    $region12: #{tpu_custom_call.1} parent=1 // pred_region
      %s29 = ssub.s32 512, 512
      %30 = vsyncadd [#allocation6], %s29
      %s31 = sshll.u32 [#allocation5], 4
      %s32 = int_to_ptr.vmem [resolvable:$true] %s31
      %37 = dma.hbm_to_vmem [thread:$0]  %s2, 512, %s32, [#allocation6], 128, 128, 8
    $region13: #{tpu_custom_call.1} parent=1 // pred_fallthru
      _
    // Predicated region
    $region14: #{tpu_custom_call.1} parent=1 // pred_check
      _
    $region15: #{tpu_custom_call.1} parent=1 // pred_check_branch
      %39 = sbr.rel (0) target = $region17
    $region16: #{tpu_custom_call.1} parent=1 // pred_region
      _
    $region17: #{tpu_custom_call.1} parent=1 // pred_fallthru
      _
    // Predicated region
    $region18: #{tpu_custom_call.1} parent=1 // pred_check
      _
    $region19: #{tpu_custom_call.1} parent=1 // pred_check_branch
      %41 = sbr.rel (0) target = $region21
    $region20: #{tpu_custom_call.1} parent=1 // pred_region
      %42 = dma.done [#allocation3], 512
    $region21: #{tpu_custom_call.1} parent=1 // pred_fallthru
      _
    // Predicated region
    $region22: #{tpu_custom_call.1} parent=1 // pred_check
      _
    $region23: #{tpu_custom_call.1} parent=1 // pred_check_branch
      %44 = sbr.rel (0) target = $region25
    $region24: #{tpu_custom_call.1} parent=1 // pred_region
      %45 = dma.done [#allocation6], 512
    $region25: #{tpu_custom_call.1} parent=1 // pred_fallthru
      _
    %v46 = vld [vmem:[#allocation2] sm:$0xff]
    %v47 = vld [vmem:[#allocation2 + $0x8] sm:$0xff]
    %v48 = vld [vmem:[#allocation2 + $0x10] sm:$0xff]
    %v49 = vld [vmem:[#allocation2 + $0x18] sm:$0xff]
    %v50 = vld [vmem:[#allocation5] sm:$0xff]
    %v51 = vld [vmem:[#allocation5 + $0x8] sm:$0xff]
    %v52 = vld [vmem:[#allocation5 + $0x10] sm:$0xff]
    %v53 = vld [vmem:[#allocation5 + $0x18] sm:$0xff]
    %vm54 = vcmask 261120
    %v56 = vsel %vm54, %v46, 0
    %v59 = vsel %vm54, %v47, 0
    %v62 = vsel %vm54, %v48, 0
    %v65 = vsel %vm54, %v49, 0
    %67 = vmatprep.subr.mxu0 0.0
    %68 = vmatpush1.msra.mxu0 %v50
    %69 = vmatprep.subr.mxu0 0.0
    %70 = vmatpush1.msra.mxu0 %v51
    %71 = vmatprep.subr.mxu0 0.0
    %72 = vmatpush1.msra.mxu0 %v52
    %73 = vmatprep.subr.mxu0 0.0
    %74 = vmatpush1.msra.mxu0 %v53
    %75 = vmatprep.subr.mxu0 0.0
    %76 = vmatpush1.msra.mxu0 0.0
    %77 = vmatprep.subr.mxu0 0.0
    %78 = vmatpush1.msra.mxu0 0.0
    %79 = vmatprep.subr.mxu0 0.0
    %80 = vmatpush1.msra.mxu0 0.0
    %81 = vmatprep.subr.mxu0 0.0
    %82 = vmatpush1.msra.mxu0 0.0
    %83 = vmatprep.subr.mxu0 0.0
    %84 = vmatpush1.msra.mxu0 0.0
    %85 = vmatprep.subr.mxu0 0.0
    %86 = vmatpush1.msra.mxu0 0.0
    %87 = vmatprep.subr.mxu0 0.0
    %88 = vmatpush1.msra.mxu0 0.0
    %89 = vmatprep.subr.mxu0 0.0
    %90 = vmatpush1.msra.mxu0 0.0
    %91 = vmatprep.subr.mxu0 0.0
    %92 = vmatpush1.msra.mxu0 0.0
    %93 = vmatprep.subr.mxu0 0.0
    %94 = vmatpush1.msra.mxu0 0.0
    %95 = vmatprep.subr.mxu0 0.0
    %96 = vmatpush1.msra.mxu0 0.0
    %97 = vmatprep.subr.mxu0 0.0
    %98 = vmatpush1.msra.mxu0 0.0
    %99 = vmatprep.subr.mxu0 0.0
    %100 = vmatpush1.msra.mxu0 0.0
    %101 = vmatprep.subr.mxu0 0.0
    %102 = vmatpush1.msra.mxu0 0.0
    %103 = vmatprep.subr.mxu0 0.0
    %104 = vmatpush1.msra.mxu0 0.0
    %105 = vmatprep.subr.mxu0 0.0
    %106 = vmatpush1.msra.mxu0 0.0
    %107 = vmatprep.subr.mxu0 0.0
    %108 = vmatpush1.msra.mxu0 0.0
    %109 = vmatprep.subr.mxu0 0.0
    %110 = vmatpush1.msra.mxu0 0.0
    %111 = vmatprep.subr.mxu0 0.0
    %112 = vmatpush1.msra.mxu0 0.0
    %113 = vmatprep.subr.mxu0 0.0
    %114 = vmatpush1.msra.mxu0 0.0
    %115 = vmatprep.subr.mxu0 0.0
    %116 = vmatpush1.msra.mxu0 0.0
    %117 = vmatprep.subr.mxu0 0.0
    %118 = vmatpush1.msra.mxu0 0.0
    %119 = vmatprep.subr.mxu0 0.0
    %120 = vmatpush1.msra.mxu0 0.0
    %121 = vmatprep.subr.mxu0 0.0
    %122 = vmatpush1.msra.mxu0 0.0
    %123 = vmatprep.subr.mxu0 0.0
    %124 = vmatpush1.msra.mxu0 0.0
    %125 = vmatprep.subr.mxu0 0.0
    %126 = vmatpush1.msra.mxu0 0.0
    %127 = vmatprep.subr.mxu0 0.0
    %128 = vmatpush1.msra.mxu0 0.0
    %129 = vmatprep.subr.mxu0 0.0
    %130 = vmatpush1.msra.mxu0 0.0
    %131 = vmatprep.mubr.f32.mxu0 0.0
    %132 = vmatmul.mubr.f32.gmra.mrb[0].mxu0 %v56
    %v133 = vpop.f32.mrb[0].mxu0
    %v134 = vadd.f32 0.0, %v133
    %v135 = vpop.f32.mrb[0].mxu0
    %136 = vmatprep.mubr.f32.mxu0 0.0
    %137 = vmatmul.mubr.f32.gmra.mrb[0].mxu0 %v59
    %v138 = vpop.f32.mrb[0].mxu0
    %v139 = vadd.f32 0.0, %v138
    %v140 = vpop.f32.mrb[0].mxu0
    %141 = vmatprep.mubr.f32.mxu0 0.0
    %142 = vmatmul.mubr.f32.gmra.mrb[0].mxu0 %v62
    %v143 = vpop.f32.mrb[0].mxu0
    %v144 = vadd.f32 0.0, %v143
    %v145 = vpop.f32.mrb[0].mxu0
    %146 = vmatprep.mubr.f32.mxu0 0.0
    %147 = vmatmul.mubr.f32.gmra.mrb[0].mxu0 %v65
    %v148 = vpop.f32.mrb[0].mxu0
    %v149 = vadd.f32 0.0, %v148
    %v150 = vpop.f32.mrb[0].mxu0
    %151 = vdwg.mxu0
    %v152 = vlaneseq
    %v153 = vand.u32 %v152, 127
    %v154 = vld [vmem:[%s0] sm:$0xff]
    %v155 = vld [vmem:[%s0 + $0x8] sm:$0xff]
    %156 = vset.pattern.permute.xlu0 0
    %157 = vperm.xlu0 %156, %v154
    %v158 = vpop.permute.xlu0 %157
    %159 = vset.pattern.permute.xlu0 0
    %160 = vperm.xlu0 %159, %v155
    %v161 = vpop.permute.xlu0 %160
    %vm162 = vcmp.eq.s32.totalorder %v153, %v158
    %vm163 = vcmp.eq.s32.totalorder %v153, %v161
    %v164 = vsel %vm162, 1, 0
    %v165 = vsel %vm163, 1, 0
    %v166 = vcvt.s32.f32 %v164
    %v167 = vcvt.s32.f32 %v165
    %v169 = vsel %vm54, %v166, 0
    %v172 = vsel %vm54, %v167, 0
    %174 = vmatprep.subr.mxu0 0.0
    %175 = vmatpush1.msra.mxu0 %v134
    %176 = vmatprep.subr.mxu0 0.0
    %177 = vmatpush1.msra.mxu0 %v139
    %178 = vmatprep.subr.mxu0 0.0
    %179 = vmatpush1.msra.mxu0 %v144
    %180 = vmatprep.subr.mxu0 0.0
    %181 = vmatpush1.msra.mxu0 %v149
    %182 = vmatprep.subr.mxu0 0.0
    %183 = vmatpush1.msra.mxu0 0.0
    %184 = vmatprep.subr.mxu0 0.0
    %185 = vmatpush1.msra.mxu0 0.0
    %186 = vmatprep.subr.mxu0 0.0
    %187 = vmatpush1.msra.mxu0 0.0
    %188 = vmatprep.subr.mxu0 0.0
    %189 = vmatpush1.msra.mxu0 0.0
    %190 = vmatprep.subr.mxu0 0.0
    %191 = vmatpush1.msra.mxu0 0.0
    %192 = vmatprep.subr.mxu0 0.0
    %193 = vmatpush1.msra.mxu0 0.0
    %194 = vmatprep.subr.mxu0 0.0
    %195 = vmatpush1.msra.mxu0 0.0
    %196 = vmatprep.subr.mxu0 0.0
    %197 = vmatpush1.msra.mxu0 0.0
    %198 = vmatprep.subr.mxu0 0.0
    %199 = vmatpush1.msra.mxu0 0.0
    %200 = vmatprep.subr.mxu0 0.0
    %201 = vmatpush1.msra.mxu0 0.0
    %202 = vmatprep.subr.mxu0 0.0
    %203 = vmatpush1.msra.mxu0 0.0
    %204 = vmatprep.subr.mxu0 0.0
    %205 = vmatpush1.msra.mxu0 0.0
    %206 = vmatprep.subr.mxu0 0.0
    %207 = vmatpush1.msra.mxu0 0.0
    %208 = vmatprep.subr.mxu0 0.0
    %209 = vmatpush1.msra.mxu0 0.0
    %210 = vmatprep.subr.mxu0 0.0
    %211 = vmatpush1.msra.mxu0 0.0
    %212 = vmatprep.subr.mxu0 0.0
    %213 = vmatpush1.msra.mxu0 0.0
    %214 = vmatprep.subr.mxu0 0.0
    %215 = vmatpush1.msra.mxu0 0.0
    %216 = vmatprep.subr.mxu0 0.0
    %217 = vmatpush1.msra.mxu0 0.0
    %218 = vmatprep.subr.mxu0 0.0
    %219 = vmatpush1.msra.mxu0 0.0
    %220 = vmatprep.subr.mxu0 0.0
    %221 = vmatpush1.msra.mxu0 0.0
    %222 = vmatprep.subr.mxu0 0.0
    %223 = vmatpush1.msra.mxu0 0.0
    %224 = vmatprep.subr.mxu0 0.0
    %225 = vmatpush1.msra.mxu0 0.0
    %226 = vmatprep.subr.mxu0 0.0
    %227 = vmatpush1.msra.mxu0 0.0
    %228 = vmatprep.subr.mxu0 0.0
    %229 = vmatpush1.msra.mxu0 0.0
    %230 = vmatprep.subr.mxu0 0.0
    %231 = vmatpush1.msra.mxu0 0.0
    %232 = vmatprep.subr.mxu0 0.0
    %233 = vmatpush1.msra.mxu0 0.0
    %234 = vmatprep.subr.mxu0 0.0
    %235 = vmatpush1.msra.mxu0 0.0
    %236 = vmatprep.subr.mxu0 0.0
    %237 = vmatpush1.msra.mxu0 0.0
    %238 = vmatprep.mubr.f32.mxu0 0.0
    %239 = vmatmul.mubr.f32.gmra.mrb[0].mxu0 %v169
    %v240 = vpop.f32.mrb[0].mxu0
    %v241 = vadd.f32 0.0, %v240
    %v242 = vpop.f32.mrb[0].mxu0
    %243 = vmatprep.mubr.f32.mxu0 0.0
    %244 = vmatmul.mubr.f32.gmra.mrb[0].mxu0 %v172
    %v245 = vpop.f32.mrb[0].mxu0
    %v246 = vadd.f32 0.0, %v245
    %v247 = vpop.f32.mrb[0].mxu0
    %248 = vdwg.mxu0
    %v249 = vsel %vm54, %v241, -inf
    %v250 = vrot.slane %v249, 4
    %v251 = vmax.f32 %v249, %v250
    %v252 = vrot.slane %v251, 2
    %v253 = vmax.f32 %v251, %v252
    %v254 = vrot.slane %v253, 1
    %v255 = vmax.f32 %v253, %v254
    %v256 = vsel %vm54, %v246, -inf
    %v257 = vrot.slane %v256, 4
    %v258 = vmax.f32 %v256, %v257
    %v259 = vrot.slane %v258, 2
    %v260 = vmax.f32 %v258, %v259
    %v261 = vrot.slane %v260, 1
    %v262 = vmax.f32 %v260, %v261
    %v263 = vld [vmem:[%s3] sm:$0x1]
    %v265 = vlaneseq
    %v266 = vshrl.u32 %v265, 7
    %v267 = vsub.s32 0, %v266
    %v268 = vrot.slane %v263, %v267
    %v270 = vadd.f32 %v255, %v268
    %v271 = vadd.f32 %v262, %v268
    %v274 = vrot.slane %v271, 7
    %vm275 = vcmask 1041409
    %v276 = vsel %vm275, %v274, %v270
    %vm278 = vcmask 254976
    %279 = vst.msk [vmem:[#allocation7] sm:$0x3] %vm278, %v276
    // Predicated region
    $region26: #{tpu_custom_call.1} parent=1 // pred_check
      _
    $region27: #{tpu_custom_call.1} parent=1 // pred_check_branch
      %281 = sbr.rel (0) target = $region29
    $region28: #{tpu_custom_call.1} parent=1 // pred_region
      %s283 = ssub.s32 32, 32
      %284 = vsyncadd [#allocation4], %s283
      %s286 = sshll.u32 [#allocation7], 4
      %s287 = int_to_ptr.vmem [resolvable:$true] %s286
      %289 = dma.vmem_to_hbm [thread:$0]  %s287, 32, %s4, [#allocation4]
    $region29: #{tpu_custom_call.1} parent=1 // pred_fallthru
      _
    // Predicated region
    $region30: #{tpu_custom_call.1} parent=1 // pred_check
      _
    $region31: #{tpu_custom_call.1} parent=1 // pred_check_branch
      %291 = sbr.rel (0) target = $region33
    $region32: #{tpu_custom_call.1} parent=1 // pred_region
      %292 = dma.done [#allocation4], 32
    $region33: #{tpu_custom_call.1} parent=1 // pred_fallthru
      _
    %293 = vsyncpa [#allocation3], 1
    %294 = vsyncpa [#allocation6], 1
    %295 = vsyncpa [#allocation4], 1

</llo_original>
